<compile_context>
chip_gen: v7x
topology: tpu7x:2x2x1
jax: 0.10.0
libtpu: 0.0.40
codegen_flags: <defaults>
</compile_context>

<pallas_src>
import functools

import jax
import jax.numpy as jnp
from jax.experimental import pallas as pl
from jax.experimental.pallas import tpu as pltpu

BN_EPS = 1e-5


def _cph_kernel(x_ref, p_ref, b_ref, o_ref):
    """Fused CPH_ROI forward.

    x_ref : (H, N, F) VMEM  -- stacked activations, one slab per head
    p_ref : (H, 3, F) VMEM  -- per head: row 0 = gamma, row 1 = beta, row 2 = w
    b_ref : (1,)      SMEM  -- shared Linear bias (scalar)
    o_ref : (H, N)    VMEM  -- lane-dense per-head outputs
    """
    n_heads = x_ref.shape[0]
    bias = b_ref[0]  # scalar read from SMEM

    for h in range(n_heads):  # static unroll (1 or 2 heads)
        x = x_ref[h].astype(jnp.float32)        # (N, F)
        p = p_ref[h].astype(jnp.float32)        # (3, F)
        gamma = p[0:1, :]                       # (1, F)
        beta = p[1:2, :]                        # (1, F)
        w = p[2:3, :]                           # (1, F)

        # --- BatchNorm1d (training-mode batch stats), single sweep ---
        inv_n = 1.0 / x.shape[0]
        mean = jnp.sum(x, axis=0, keepdims=True) * inv_n        # (1, F)
        meansq = jnp.sum(x * x, axis=0, keepdims=True) * inv_n  # (1, F)
        var = jnp.maximum(meansq - mean * mean, 0.0)            # clamp cancellation

        # --- Fold BN affine + Linear into one effective weight + offset ---
        s = gamma * jax.lax.rsqrt(var + BN_EPS)                 # (1, F)
        w_eff = s * w                                           # (1, F)
        c = jnp.sum((beta - mean * s) * w) + bias               # scalar

        # --- Linear(F, 1): one VPU multiply + XLU lane reduce, no MXU ---
        out_row = jnp.sum(x * w_eff, axis=-1) + c               # (N,)
        o_ref[h, :] = out_row.astype(o_ref.dtype)


def _fused_cph_call(xs, gammas, betas, ws, shared_b):
    """xs/gammas/betas/ws: per-head lists. Returns (n_heads, N)."""
    n_heads = len(xs)
    N, F = xs[0].shape
    dtype = xs[0].dtype

    # Coalesce the tiny inputs into 3 arrays -> 3 DMA descriptors total.
    x_stacked = jnp.stack(xs, axis=0)                               # (H, N, F)
    p_stacked = jnp.stack(
        [jnp.stack([g.reshape(F), b.reshape(F), w.reshape(F)], axis=0)
         for g, b, w in zip(gammas, betas, ws)],
        axis=0,
    )                                                               # (H, 3, F)
    b_flat = shared_b.reshape(1).astype(jnp.float32)                # (1,) SMEM

    return pl.pallas_call(
        _cph_kernel,
        out_shape=jax.ShapeDtypeStruct((n_heads, N), dtype),
        in_specs=[
            pl.BlockSpec(memory_space=pltpu.MemorySpace.VMEM),
            pl.BlockSpec(memory_space=pltpu.MemorySpace.VMEM),
            pl.BlockSpec(memory_space=pltpu.MemorySpace.SMEM),
        ],
        out_specs=pl.BlockSpec(memory_space=pltpu.MemorySpace.VMEM),
    )(x_stacked, p_stacked, b_flat)


def cph_roi_forward(tar_feature, att_feature, params, istesting=False):
    """CPH_ROI.forward. The Linear bias is shared between both heads."""
    xs = [tar_feature]
    gammas = [params["main_gamma"]]
    betas = [params["main_beta"]]
    ws = [params["main_w"]]
    if not istesting:
        xs.append(att_feature)
        gammas.append(params["aux_gamma"])
        betas.append(params["aux_beta"])
        ws.append(params["aux_w"])

    out = _fused_cph_call(xs, gammas, betas, ws, params["shared_b"])  # (H, N)

    main_out = out[0].reshape(-1, 1)
    if istesting:
        return main_out
    aux_out = out[1].reshape(-1, 1)
    return main_out, aux_out


def _cox_reference(x, gamma, beta, w, b):
    """Pure-JAX reference (two-pass BN) for correctness checking."""
    mean = jnp.mean(x, axis=0, keepdims=True)
    var = jnp.mean((x - mean) ** 2, axis=0, keepdims=True)
    xhat = (x - mean) / jnp.sqrt(var + BN_EPS)
    y = xhat * gamma + beta
    return y @ w.T + b


def init_params(key, n_input):
    """Deterministic synthetic parameter init (PyTorch-like scales/shapes)."""
    k1, k2, k3, k4, k5, k6, k7 = jax.random.split(key, 7)
    bound = 1.0 / jnp.sqrt(jnp.float32(n_input))
    return {
        # main Cox head
        "main_gamma": jax.random.uniform(k1, (n_input,), jnp.float32, 0.5, 1.5),
        "main_beta": jax.random.uniform(k2, (n_input,), jnp.float32, -0.5, 0.5),
        "main_w": jax.random.uniform(k3, (1, n_input), jnp.float32, -bound, bound),
        # auxiliary Cox head
        "aux_gamma": jax.random.uniform(k4, (n_input,), jnp.float32, 0.5, 1.5),
        "aux_beta": jax.random.uniform(k5, (n_input,), jnp.float32, -0.5, 0.5),
        "aux_w": jax.random.uniform(k6, (1, n_input), jnp.float32, -bound, bound),
        # bias shared between both Linear layers (as in CPH_ROI.__init__)
        "shared_b": jax.random.uniform(k7, (1,), jnp.float32, -bound, bound),
    }


if __name__ == "__main__":
    key = jax.random.PRNGKey(0)
    batch, n_input = 8, 32

    kx, ka, kp = jax.random.split(key, 3)
    tar_feature = jax.random.normal(kx, (batch, n_input), jnp.float32)
    att_feature = jax.random.normal(ka, (batch, n_input), jnp.float32)
    params = init_params(kp, n_input)

    fwd = jax.jit(functools.partial(cph_roi_forward, istesting=False))
    main_out, aux_out = fwd(tar_feature, att_feature, params)
    jax.block_until_ready((main_out, aux_out))

    # Also exercise the istesting=True path.
    test_out = jax.jit(functools.partial(cph_roi_forward, istesting=True))(
        tar_feature, att_feature, params
    )
    jax.block_until_ready(test_out)

    # Verify against pure-JAX reference.
    ref_main = _cox_reference(
        tar_feature, params["main_gamma"], params["main_beta"],
        params["main_w"], params["shared_b"],
    )
    ref_aux = _cox_reference(
        att_feature, params["aux_gamma"], params["aux_beta"],
        params["aux_w"], params["shared_b"],
    )
    assert main_out.shape == (batch, 1) and aux_out.shape == (batch, 1)
    assert jnp.allclose(main_out, ref_main, atol=1e-5, rtol=1e-5)
    assert jnp.allclose(aux_out, ref_aux, atol=1e-5, rtol=1e-5)
    assert jnp.allclose(test_out, main_out, atol=1e-6, rtol=1e-6)

    print("KERNEL_OK")
</pallas_src>

<mosaic_0001>
module attributes {stable_mosaic.version = 11 : i64} {
  func.func @_cph_kernel(%arg0: memref<2x8x32xf32, #tpu.memory_space<vmem>>, %arg1: memref<2x3x32xf32, #tpu.memory_space<vmem>>, %arg2: memref<1xf32, #tpu.memory_space<smem>>, %arg3: memref<2x8xf32, #tpu.memory_space<vmem>>) attributes {dimension_semantics = [], scalar_prefetch = 0 : i64, scratch_operands = 0 : i64, tpu.core_type = #tpu.core_type<tc>} {
    %c0 = arith.constant 0 : index
    %0 = memref.load %arg2[%c0] : memref<1xf32, #tpu.memory_space<smem>>
    %c0_0 = arith.constant 0 : index
    %c0_1 = arith.constant 0 : index
    %c0_2 = arith.constant 0 : index
    %1 = vector.load %arg0[%c0_0, %c0_1, %c0_2] : memref<2x8x32xf32, #tpu.memory_space<vmem>>, vector<1x8x32xf32>
    %2 = vector.shape_cast %1 : vector<1x8x32xf32> to vector<8x32xf32>
    %c0_3 = arith.constant 0 : index
    %c0_4 = arith.constant 0 : index
    %c0_5 = arith.constant 0 : index
    %3 = vector.load %arg1[%c0_3, %c0_4, %c0_5] : memref<2x3x32xf32, #tpu.memory_space<vmem>>, vector<1x3x32xf32>
    %4 = vector.shape_cast %3 : vector<1x3x32xf32> to vector<3x32xf32>
    %5 = vector.extract_strided_slice %4 {offsets = [0, 0], sizes = [1, 32], strides = [1, 1]} : vector<3x32xf32> to vector<1x32xf32>
    %6 = vector.extract_strided_slice %4 {offsets = [1, 0], sizes = [1, 32], strides = [1, 1]} : vector<3x32xf32> to vector<1x32xf32>
    %7 = vector.extract_strided_slice %4 {offsets = [2, 0], sizes = [1, 32], strides = [1, 1]} : vector<3x32xf32> to vector<1x32xf32>
    %cst = arith.constant dense<0.000000e+00> : vector<32xf32>
    %8 = vector.multi_reduction <add>, %2, %cst [0] : vector<8x32xf32> to vector<32xf32>
    %9 = vector.shape_cast %8 : vector<32xf32> to vector<1x32xf32>
    %cst_6 = arith.constant 1.250000e-01 : f32
    %10 = vector.broadcast %cst_6 : f32 to vector<1x32xf32>
    %11 = arith.mulf %9, %10 : vector<1x32xf32>
    %12 = arith.mulf %2, %2 : vector<8x32xf32>
    %cst_7 = arith.constant dense<0.000000e+00> : vector<32xf32>
    %13 = vector.multi_reduction <add>, %12, %cst_7 [0] : vector<8x32xf32> to vector<32xf32>
    %14 = vector.shape_cast %13 : vector<32xf32> to vector<1x32xf32>
    %cst_8 = arith.constant 1.250000e-01 : f32
    %15 = vector.broadcast %cst_8 : f32 to vector<1x32xf32>
    %16 = arith.mulf %14, %15 : vector<1x32xf32>
    %17 = arith.mulf %11, %11 : vector<1x32xf32>
    %18 = arith.subf %16, %17 : vector<1x32xf32>
    %cst_9 = arith.constant 0.000000e+00 : f32
    %19 = vector.broadcast %cst_9 : f32 to vector<1x32xf32>
    %20 = arith.maximumf %18, %19 : vector<1x32xf32>
    %cst_10 = arith.constant 9.99999974E-6 : f32
    %21 = vector.broadcast %cst_10 : f32 to vector<1x32xf32>
    %22 = arith.addf %20, %21 : vector<1x32xf32>
    %23 = math.rsqrt %22 : vector<1x32xf32>
    %24 = arith.mulf %5, %23 : vector<1x32xf32>
    %25 = arith.mulf %24, %7 : vector<1x32xf32>
    %26 = arith.mulf %11, %24 : vector<1x32xf32>
    %27 = arith.subf %6, %26 : vector<1x32xf32>
    %28 = arith.mulf %27, %7 : vector<1x32xf32>
    %29 = vector.shape_cast %28 : vector<1x32xf32> to vector<1x1x32xf32>
    %cst_11 = arith.constant dense<0.000000e+00> : vector<1xf32>
    %30 = vector.multi_reduction <add>, %29, %cst_11 [1, 2] : vector<1x1x32xf32> to vector<1xf32>
    %31 = vector.shape_cast %30 : vector<1xf32> to vector<1x1x1xf32>
    %32 = vector.extract %31[0, 0, 0] : f32 from vector<1x1x1xf32>
    %33 = arith.addf %32, %0 : f32
    %34 = vector.broadcast %25 : vector<1x32xf32> to vector<8x32xf32>
    %35 = arith.mulf %2, %34 : vector<8x32xf32>
    %cst_12 = arith.constant dense<0.000000e+00> : vector<8xf32>
    %36 = vector.multi_reduction <add>, %35, %cst_12 [1] : vector<8x32xf32> to vector<8xf32>
    %37 = vector.broadcast %33 : f32 to vector<8xf32>
    %38 = arith.addf %36, %37 : vector<8xf32>
    %c0_13 = arith.constant 0 : index
    %c0_14 = arith.constant 0 : index
    %39 = vector.load %arg3[%c0_13, %c0_14] : memref<2x8xf32, #tpu.memory_space<vmem>>, vector<1x8xf32>
    %40 = vector.shape_cast %39 : vector<1x8xf32> to vector<8xf32>
    %41 = vector.shape_cast %38 : vector<8xf32> to vector<1x8xf32>
    tpu.vector_store %arg3[%c0_13, %c0_14], %41 {strides = array<i32>} : memref<2x8xf32, #tpu.memory_space<vmem>>, vector<1x8xf32>,
    %c1 = arith.constant 1 : index
    %c0_15 = arith.constant 0 : index
    %c0_16 = arith.constant 0 : index
    %42 = vector.load %arg0[%c1, %c0_15, %c0_16] : memref<2x8x32xf32, #tpu.memory_space<vmem>>, vector<1x8x32xf32>
    %43 = vector.shape_cast %42 : vector<1x8x32xf32> to vector<8x32xf32>
    %c1_17 = arith.constant 1 : index
    %c0_18 = arith.constant 0 : index
    %c0_19 = arith.constant 0 : index
    %44 = vector.load %arg1[%c1_17, %c0_18, %c0_19] : memref<2x3x32xf32, #tpu.memory_space<vmem>>, vector<1x3x32xf32>
    %45 = vector.shape_cast %44 : vector<1x3x32xf32> to vector<3x32xf32>
    %46 = vector.extract_strided_slice %45 {offsets = [0, 0], sizes = [1, 32], strides = [1, 1]} : vector<3x32xf32> to vector<1x32xf32>
    %47 = vector.extract_strided_slice %45 {offsets = [1, 0], sizes = [1, 32], strides = [1, 1]} : vector<3x32xf32> to vector<1x32xf32>
    %48 = vector.extract_strided_slice %45 {offsets = [2, 0], sizes = [1, 32], strides = [1, 1]} : vector<3x32xf32> to vector<1x32xf32>
    %cst_20 = arith.constant dense<0.000000e+00> : vector<32xf32>
    %49 = vector.multi_reduction <add>, %43, %cst_20 [0] : vector<8x32xf32> to vector<32xf32>
    %50 = vector.shape_cast %49 : vector<32xf32> to vector<1x32xf32>
    %cst_21 = arith.constant 1.250000e-01 : f32
    %51 = vector.broadcast %cst_21 : f32 to vector<1x32xf32>
    %52 = arith.mulf %50, %51 : vector<1x32xf32>
    %53 = arith.mulf %43, %43 : vector<8x32xf32>
    %cst_22 = arith.constant dense<0.000000e+00> : vector<32xf32>
    %54 = vector.multi_reduction <add>, %53, %cst_22 [0] : vector<8x32xf32> to vector<32xf32>
    %55 = vector.shape_cast %54 : vector<32xf32> to vector<1x32xf32>
    %cst_23 = arith.constant 1.250000e-01 : f32
    %56 = vector.broadcast %cst_23 : f32 to vector<1x32xf32>
    %57 = arith.mulf %55, %56 : vector<1x32xf32>
    %58 = arith.mulf %52, %52 : vector<1x32xf32>
    %59 = arith.subf %57, %58 : vector<1x32xf32>
    %cst_24 = arith.constant 0.000000e+00 : f32
    %60 = vector.broadcast %cst_24 : f32 to vector<1x32xf32>
    %61 = arith.maximumf %59, %60 : vector<1x32xf32>
    %cst_25 = arith.constant 9.99999974E-6 : f32
    %62 = vector.broadcast %cst_25 : f32 to vector<1x32xf32>
    %63 = arith.addf %61, %62 : vector<1x32xf32>
    %64 = math.rsqrt %63 : vector<1x32xf32>
    %65 = arith.mulf %46, %64 : vector<1x32xf32>
    %66 = arith.mulf %65, %48 : vector<1x32xf32>
    %67 = arith.mulf %52, %65 : vector<1x32xf32>
    %68 = arith.subf %47, %67 : vector<1x32xf32>
    %69 = arith.mulf %68, %48 : vector<1x32xf32>
    %70 = vector.shape_cast %69 : vector<1x32xf32> to vector<1x1x32xf32>
    %cst_26 = arith.constant dense<0.000000e+00> : vector<1xf32>
    %71 = vector.multi_reduction <add>, %70, %cst_26 [1, 2] : vector<1x1x32xf32> to vector<1xf32>
    %72 = vector.shape_cast %71 : vector<1xf32> to vector<1x1x1xf32>
    %73 = vector.extract %72[0, 0, 0] : f32 from vector<1x1x1xf32>
    %74 = arith.addf %73, %0 : f32
    %75 = vector.broadcast %66 : vector<1x32xf32> to vector<8x32xf32>
    %76 = arith.mulf %43, %75 : vector<8x32xf32>
    %cst_27 = arith.constant dense<0.000000e+00> : vector<8xf32>
    %77 = vector.multi_reduction <add>, %76, %cst_27 [1] : vector<8x32xf32> to vector<8xf32>
    %78 = vector.broadcast %74 : f32 to vector<8xf32>
    %79 = arith.addf %77, %78 : vector<8xf32>
    %c1_28 = arith.constant 1 : index
    %c0_29 = arith.constant 0 : index
    %80 = vector.load %arg3[%c1_28, %c0_29] : memref<2x8xf32, #tpu.memory_space<vmem>>, vector<1x8xf32>
    %81 = vector.shape_cast %80 : vector<1x8xf32> to vector<8xf32>
    %82 = vector.shape_cast %79 : vector<8xf32> to vector<1x8xf32>
    tpu.vector_store %arg3[%c1_28, %c0_29], %82 {strides = array<i32>} : memref<2x8xf32, #tpu.memory_space<vmem>>, vector<1x8xf32>,
    return
  }
}

</mosaic_0001>

<llo_original>
// kernel: cph_roi_forward.1
$region0: #{cph_roi_forward.1}
  #allocation0 [shape = 'u32[]', space=smem, size = 0x4, offset = 0x4, fixed_abs, tag = 'smem constant byte address 0x4 - core index']
  #allocation1 [shape = 'u32[144,128]{1,0:T(1,128)}', space=vmem, size = 0x12000, scoped, tag = 'internal scratch']
  #allocation2 [shape = 'f32[1]{0:T(128)S(6)}', space=smem, size = 0x200, scoped, tag = 'scoped memory for cph_roi_forward.1']
  %s0 = inlined_call_operand.vmem [shape: f32[2,8,32], index: 0, kind: input, shape index: {}]
  %s1 = inlined_call_operand.vmem [shape: f32[2,3,32], index: 1, kind: input, shape index: {}]
  %s2 = inlined_call_operand.<no memory space> [shape: f32[1], index: 2, kind: input, shape index: {}]
  %s3 = inlined_call_operand.vmem [shape: f32[2,8], index: 3, kind: output, shape index: {}]
  %s4 = sld [smem:[#allocation0]]
  $region22: #{cph_roi_forward.1} parent=0
    _
  %s6 = ssub.s32 1, %s4
  %s7 = scalar_select 0, %s6, %s4
  %8 = sst [smem:[#allocation2]] %s2
  // Predicated region
  $region2: #{cph_roi_forward.1} parent=0 // pred_check
    _
  $region3: #{cph_roi_forward.1} parent=0 // pred_check_branch
    %10 = sbr.rel (0) target = $region5
  $region4: #{cph_roi_forward.1} parent=0 // pred_region
    _
  $region5: #{cph_roi_forward.1} parent=0 // pred_fallthru
    _
  // Predicated region
  $region6: #{cph_roi_forward.1} parent=0 // pred_check
    _
  $region7: #{cph_roi_forward.1} parent=0 // pred_check_branch
    %12 = sbr.rel (0) target = $region9
  $region8: #{cph_roi_forward.1} parent=0 // pred_region
    _
  $region9: #{cph_roi_forward.1} parent=0 // pred_fallthru
    _
  // Predicated region
  $region10: #{cph_roi_forward.1} parent=0 // pred_check
    _
  $region11: #{cph_roi_forward.1} parent=0 // pred_check_branch
    %14 = sbr.rel (0) target = $region13
  $region12: #{cph_roi_forward.1} parent=0 // pred_region
    _
  $region13: #{cph_roi_forward.1} parent=0 // pred_fallthru
    _
  %s15 = sld [smem:[#allocation2]]
  %v16 = vld [vmem:[%s0] sm:$0xff]
  %v17 = vld [vmem:[%s1] sm:$0x7]
  %vm18 = vcmask 261120
  %v19 = vsel %vm18, %v16, 0.0
  %v20 = vrot.slane %v19, 4
  %v21 = vadd.f32 %v19, %v20
  %v22 = vrot.slane %v21, 2
  %v23 = vadd.f32 %v21, %v22
  %v24 = vrot.slane %v23, 1
  %v25 = vadd.f32 %v23, %v24
  %v26 = vmul.f32 %v25, 0.125
  %v27 = vmul.f32 %v16, %v16
  %v28 = vsel %vm18, %v27, 0.0
  %v29 = vrot.slane %v28, 4
  %v30 = vadd.f32 %v28, %v29
  %v31 = vrot.slane %v30, 2
  %v32 = vadd.f32 %v30, %v31
  %v33 = vrot.slane %v32, 1
  %v34 = vadd.f32 %v32, %v33
  %v35 = vmul.f32 %v34, 0.125
  %v36 = vmul.f32 %v26, %v26
  %v37 = vsub.f32 %v35, %v36
  %v38 = vmax.f32 %v37, 0.0
  %v39 = vadd.f32 %v38, 1e-05
  %v40 = vrsqrt.pop %v39
  %v41 = vmul.f32 %v17, %v40
  %v43 = vrot.slane %v17, 2
  %v45 = vmul.f32 %v41, %v43
  %v46 = vmul.f32 %v26, %v41
  %v48 = vrot.slane %v46, 7
  %v50 = vsub.f32 %v17, %v48
  %v51 = vrot.slane %v17, 1
  %v53 = vmul.f32 %v50, %v51
  %v55 = vrot.slane %v53, 1
  %vm57 = vcmask 253952
  %v58 = vsel %vm57, %v55, 0.0
  %59 = vadd.xlane.f32.xlu0 %v58
  %v60 = vpop.xlane.xlu0 %59
  %v61 = vrot.slane %v60, 4
  %v62 = vadd.f32 %v60, %v61
  %v63 = vrot.slane %v62, 2
  %v64 = vadd.f32 %v62, %v63
  %v65 = vrot.slane %v64, 1
  %v66 = vadd.f32 %v64, %v65
  %s67 = vtos %v66
  %s68 = sadd.f32 %s67, %s15
  %v69 = vlaneseq
  %v70 = vshrl.u32 %v69, 7
  %v71 = vsub.s32 0, %v70
  %v72 = vrot.slane %v45, %v71
  %v73 = vmul.f32 %v16, %v72
  %v74 = vsel %vm18, %v73, 0.0
  %75 = vadd.xlane.f32.xlu0 %v74
  %v76 = vpop.xlane.xlu0 %75
  %v77 = vstv %s68
  %v78 = vadd.f32 %v76, %v77
  %v80 = vlaneseq
  %v81 = vand.u32 %v80, 127
  %v82 = vlaneseq
  %v83 = vshrl.u32 %v82, 7
  %v84 = vsub.s32 %v81, %v83
  %v85 = vrot.slane %v78, %v84
  %vm87 = vcmask 57344
  %88 = vst.msk [vmem:[%s3] sm:$0x1] %vm87, %v85
  %s89 = scalar_lea.vmem %s0, 8
  %v90 = vld [vmem:[%s89] sm:$0xff]
  %s91 = scalar_lea.vmem %s1, 4
  %v92 = vld [vmem:[%s91] sm:$0x7]
  %v93 = vsel %vm18, %v90, 0.0
  %v94 = vrot.slane %v93, 4
  %v95 = vadd.f32 %v93, %v94
  %v96 = vrot.slane %v95, 2
  %v97 = vadd.f32 %v95, %v96
  %v98 = vrot.slane %v97, 1
  %v99 = vadd.f32 %v97, %v98
  %v100 = vmul.f32 %v99, 0.125
  %v101 = vmul.f32 %v90, %v90
  %v102 = vsel %vm18, %v101, 0.0
  %v103 = vrot.slane %v102, 4
  %v104 = vadd.f32 %v102, %v103
  %v105 = vrot.slane %v104, 2
  %v106 = vadd.f32 %v104, %v105
  %v107 = vrot.slane %v106, 1
  %v108 = vadd.f32 %v106, %v107
  %v109 = vmul.f32 %v108, 0.125
  %v110 = vmul.f32 %v100, %v100
  %v111 = vsub.f32 %v109, %v110
  %v112 = vmax.f32 %v111, 0.0
  %v113 = vadd.f32 %v112, 1e-05
  %v114 = vrsqrt.pop %v113
  %v115 = vmul.f32 %v92, %v114
  %v117 = vrot.slane %v92, 2
  %v119 = vmul.f32 %v115, %v117
  %v120 = vmul.f32 %v100, %v115
  %v122 = vrot.slane %v120, 7
  %v124 = vsub.f32 %v92, %v122
  %v125 = vrot.slane %v92, 1
  %v127 = vmul.f32 %v124, %v125
  %v129 = vrot.slane %v127, 1
  %v131 = vsel %vm57, %v129, 0.0
  %132 = vadd.xlane.f32.xlu0 %v131
  %v133 = vpop.xlane.xlu0 %132
  %v134 = vrot.slane %v133, 4
  %v135 = vadd.f32 %v133, %v134
  %v136 = vrot.slane %v135, 2
  %v137 = vadd.f32 %v135, %v136
  %v138 = vrot.slane %v137, 1
  %v139 = vadd.f32 %v137, %v138
  %s140 = vtos %v139
  %s141 = sadd.f32 %s140, %s15
  %v142 = vlaneseq
  %v143 = vshrl.u32 %v142, 7
  %v144 = vsub.s32 0, %v143
  %v145 = vrot.slane %v119, %v144
  %v146 = vmul.f32 %v90, %v145
  %v147 = vsel %vm18, %v146, 0.0
  %148 = vadd.xlane.f32.xlu0 %v147
  %v149 = vpop.xlane.xlu0 %148
  %v150 = vstv %s141
  %v151 = vadd.f32 %v149, %v150
  %v153 = vlaneseq
  %v154 = vshrl.u32 %v153, 7
  %v155 = vsub.s32 %v81, %v154
  %v156 = vrot.slane %v151, %v155
  %158 = vst.msk [vmem:[%s3 + $0x1] sm:$0x1] %vm87, %v156
  // Predicated region
  $region14: #{cph_roi_forward.1} parent=0 // pred_check
    _
  $region15: #{cph_roi_forward.1} parent=0 // pred_check_branch
    %160 = sbr.rel (0) target = $region17
  $region16: #{cph_roi_forward.1} parent=0 // pred_region
    _
  $region17: #{cph_roi_forward.1} parent=0 // pred_fallthru
    _
  // Predicated region
  $region18: #{cph_roi_forward.1} parent=0 // pred_check
    _
  $region19: #{cph_roi_forward.1} parent=0 // pred_check_branch
    %162 = sbr.rel (0) target = $region21
  $region20: #{cph_roi_forward.1} parent=0 // pred_region
    _
  $region21: #{cph_roi_forward.1} parent=0 // pred_fallthru
    _

</llo_original>
